<compile_context>
chip_gen: v5e
topology: v5e:2x2
jax: 0.10.0
libtpu: 0.0.40
codegen_flags: <defaults>
</compile_context>

<pallas_src>
import numpy as np
import jax
import jax.numpy as jnp
from jax.experimental import pallas as pl
from jax.experimental.pallas import tpu as pltpu


# ---------------------------------------------------------------------------
# Parameter slab layout (single [128, 128] float32 buffer)
#   rows   0:24, cols  0:3   W1_blk  (block-diag soil/veg/angle Linear(1,8) weights)
#   rows   0:24, cols  4:5   b1_blk
#   rows  24:27, cols  0:24  W2_blk  (block-diag Linear(8,1) weights)
#   rows  24:27, cols 24:25  b2_blk
#   rows  28:29, cols  0:32  Wm3     (Linear(32,1) weight, row vector)
#   rows  28:29, cols 32:33  bm3
#   rows  32:96, cols  0:1   Wm1_sigma (Linear(8,64) weight column for sigma0)
#   rows  32:96, cols  1:8   Wm1_x     (Linear(8,64) weight columns for raw x)
#   rows  32:96, cols  8:9   bm1
#   rows 96:128, cols  0:64  Wm2     (Linear(64,32) weight)
#   rows 96:128, cols 64:65  bm2
# ---------------------------------------------------------------------------


def hybrid_kernel(x_ref, p_ref, o_ref):
    x = x_ref[...]                                          # [7, TB]

    # --- unpack resident parameter slab (static slices) ---
    w1b  = p_ref[0:24, 0:3]                                 # [24, 3]
    b1b  = p_ref[0:24, 4:5]                                 # [24, 1]
    w2b  = p_ref[24:27, 0:24]                               # [3, 24]
    b2b  = p_ref[24:27, 24:25]                              # [3, 1]
    wm3  = p_ref[28:29, 0:32]                               # [1, 32]
    bm3  = p_ref[28:29, 32:33]                              # [1, 1]
    wm1s = p_ref[32:96, 0:1]                                # [64, 1]
    wm1x = p_ref[32:96, 1:8]                                # [64, 7]
    bm1  = p_ref[32:96, 8:9]                                # [64, 1]
    wm2  = p_ref[96:128, 0:64]                              # [32, 64]
    bm2  = p_ref[96:128, 64:65]                             # [32, 1]

    # --- WCMInspiredModule: soil / veg / angle fused block-diagonally ---
    x3 = x[0:3, :]                                          # [3, TB] (SM, LAI, IncAngle)
    h = jnp.maximum(
        jnp.dot(w1b, x3, preferred_element_type=jnp.float32) + b1b, 0.0)   # [24, TB]
    phys = jnp.dot(w2b, h, preferred_element_type=jnp.float32) + b2b       # [3, TB]

    soil_sig  = phys[0:1, :]
    veg_attn  = jnp.exp(-jnp.maximum(phys[1:2, :], 0.0))    # exp(-relu(veg_transform))
    angle_mod = phys[2:3, :]
    sigma0 = soil_sig * veg_attn + angle_mod                # [1, TB]

    # --- MLP on x_cat = [sigma0, x] without materializing the concat ---
    h1 = jnp.maximum(
        wm1s * sigma0
        + jnp.dot(wm1x, x, preferred_element_type=jnp.float32)
        + bm1, 0.0)                                         # [64, TB]
    h2 = jnp.maximum(
        jnp.dot(wm2, h1, preferred_element_type=jnp.float32) + bm2, 0.0)   # [32, TB]
    o_ref[...] = jnp.dot(wm3, h2, preferred_element_type=jnp.float32) + bm3  # [1, TB]


def full_hybrid_forward(x, param_slab, *, tb=512):
    """x: [B, 7] float32, param_slab: [128, 128] float32 -> [B, 1] float32."""
    B = x.shape[0]
    # lane tile: multiple of 128, no bigger than needed; modest so per-step VMEM stays
    # tiny (well under v5e's 16 MiB scoped default and v7x's 64 MiB physical VMEM).
    tb = int(min(tb, max(128, ((B + 127) // 128) * 128)))
    b_pad = ((B + tb - 1) // tb) * tb

    xt = jnp.transpose(x.astype(jnp.float32))               # [7, B] (batch on lanes)
    if b_pad != B:
        xt = jnp.pad(xt, ((0, 0), (0, b_pad - B)))

    grid = (b_pad // tb,)
    flops = 2 * b_pad * (24 * 3 + 3 * 24 + 64 * 8 + 32 * 64 + 32)
    bytes_accessed = 7 * b_pad * 4 + b_pad * 4 + int(param_slab.size) * 4

    out_t = pl.pallas_call(
        hybrid_kernel,
        out_shape=jax.ShapeDtypeStruct((1, b_pad), jnp.float32),
        grid=grid,
        in_specs=[
            pl.BlockSpec((7, tb), lambda i: (0, i)),         # batch tiles of x
            pl.BlockSpec((128, 128), lambda i: (0, 0)),      # params: resident, one DMA
        ],
        out_specs=pl.BlockSpec((1, tb), lambda i: (0, i)),   # lane-dense output
        compiler_params=pltpu.CompilerParams(
            dimension_semantics=("parallel",),
            vmem_limit_bytes=32 * 1024 * 1024,
        ),
        cost_estimate=pl.CostEstimate(
            flops=flops, transcendentals=b_pad, bytes_accessed=bytes_accessed),
    )(xt, param_slab)

    return jnp.transpose(out_t[:, :B])                       # [B, 1]


# ---------------------------------------------------------------------------
# Parameter construction (PyTorch [out, in] convention) and host-side packing
# ---------------------------------------------------------------------------
def _linear_params(key, fan_in, fan_out):
    kw, kb = jax.random.split(key)
    bound = 1.0 / np.sqrt(float(fan_in))
    w = jax.random.uniform(kw, (fan_out, fan_in), jnp.float32, -bound, bound)
    b = jax.random.uniform(kb, (fan_out,), jnp.float32, -bound, bound)
    return w, b


def init_params(key):
    keys = jax.random.split(key, 9)
    ws1, bs1 = _linear_params(keys[0], 1, 8)   # soil_transform
    ws2, bs2 = _linear_params(keys[1], 8, 1)
    wv1, bv1 = _linear_params(keys[2], 1, 8)   # veg_transform
    wv2, bv2 = _linear_params(keys[3], 8, 1)
    wa1, ba1 = _linear_params(keys[4], 1, 8)   # angle_transform
    wa2, ba2 = _linear_params(keys[5], 8, 1)
    wm1, bm1 = _linear_params(keys[6], 8, 64)  # mlp
    wm2, bm2 = _linear_params(keys[7], 64, 32)
    wm3, bm3 = _linear_params(keys[8], 32, 1)
    return (ws1, bs1, ws2, bs2, wv1, bv1, wv2, bv2, wa1, ba1, wa2, ba2,
            wm1, bm1, wm2, bm2, wm3, bm3)


def pack_params(params):
    (ws1, bs1, ws2, bs2, wv1, bv1, wv2, bv2, wa1, ba1, wa2, ba2,
     wm1, bm1, wm2, bm2, wm3, bm3) = [np.asarray(p, np.float32) for p in params]
    P = np.zeros((128, 128), np.float32)
    # block-diagonal physics layer 1: [24, 3]  (soil | veg | angle)
    P[0:8,   0] = ws1[:, 0]; P[0:8,   4] = bs1
    P[8:16,  1] = wv1[:, 0]; P[8:16,  4] = bv1
    P[16:24, 2] = wa1[:, 0]; P[16:24, 4] = ba1
    # block-diagonal physics layer 2: [3, 24]
    P[24, 0:8]   = ws2[0]; P[24, 24] = bs2[0]
    P[25, 8:16]  = wv2[0]; P[25, 24] = bv2[0]
    P[26, 16:24] = wa2[0]; P[26, 24] = ba2[0]
    # mlp layer 3
    P[28, 0:32] = wm3[0]; P[28, 32] = bm3[0]
    # mlp layer 1, pre-split for the concat trick: col 0 = sigma0 weight, cols 1:8 = x
    P[32:96, 0]   = wm1[:, 0]
    P[32:96, 1:8] = wm1[:, 1:8]
    P[32:96, 8]   = bm1
    # mlp layer 2
    P[96:128, 0:64] = wm2
    P[96:128, 64]   = bm2
    return jnp.asarray(P)


def reference_forward(x, params):
    """Pure-JAX reference mirroring the PyTorch module."""
    (ws1, bs1, ws2, bs2, wv1, bv1, wv2, bv2, wa1, ba1, wa2, ba2,
     wm1, bm1, wm2, bm2, wm3, bm3) = params

    def two(v, w1, b1, w2, b2):
        h = jax.nn.relu(v @ w1.T + b1)
        return h @ w2.T + b2

    sm, lai, ang = x[:, 0:1], x[:, 1:2], x[:, 2:3]
    soil_sig = two(sm, ws1, bs1, ws2, bs2)
    veg_attn = jnp.exp(-jax.nn.relu(two(lai, wv1, bv1, wv2, bv2)))
    angle_mod = two(ang, wa1, ba1, wa2, ba2)
    sigma0 = soil_sig * veg_attn + angle_mod
    xc = jnp.concatenate([sigma0, x], axis=1)
    h1 = jax.nn.relu(xc @ wm1.T + bm1)
    h2 = jax.nn.relu(h1 @ wm2.T + bm2)
    return h2 @ wm3.T + bm3


if __name__ == "__main__":
    key = jax.random.PRNGKey(0)
    kx, kp = jax.random.split(key)

    B = 512                                   # small test batch; features = 7
    x = jax.random.normal(kx, (B, 7), jnp.float32)
    params = init_params(kp)
    slab = pack_params(params)

    out = full_hybrid_forward(x, slab, tb=128)   # grid of 4 batch tiles
    out = jax.block_until_ready(out)
    assert out.shape == (B, 1) and out.dtype == jnp.float32

    ref = reference_forward(x, params)
    assert jnp.allclose(out, ref, rtol=2e-3, atol=2e-3), float(jnp.max(jnp.abs(out - ref)))

    print("KERNEL_OK")
</pallas_src>

<mosaic_0001>
module attributes {stable_mosaic.version = 11 : i64} {
  func.func @hybrid_kernel(%arg0: i32, %arg1: memref<7x128xf32, #tpu.memory_space<vmem>>, %arg2: memref<128x128xf32, #tpu.memory_space<vmem>>, %arg3: memref<1x128xf32, #tpu.memory_space<vmem>>) attributes {dimension_semantics = [#tpu.dimension_semantics<parallel>], iteration_bounds = array<i64: 4>, scalar_prefetch = 0 : i64, scratch_operands = 0 : i64, tpu.core_type = #tpu.core_type<tc>, window_params = [{transform_indices = @transform_0, window_bounds = array<i64: 7, 128>}, {pipeline_mode = #tpu.pipeline_mode<synchronous>, transform_indices = @transform_1, window_bounds = array<i64: 128, 128>}, {transform_indices = @transform_2, window_bounds = array<i64: 1, 128>}]} {
    %c0 = arith.constant 0 : index
    %c0_0 = arith.constant 0 : index
    %0 = vector.load %arg1[%c0, %c0_0] : memref<7x128xf32, #tpu.memory_space<vmem>>, vector<7x128xf32>
    %c0_1 = arith.constant 0 : index
    %c0_2 = arith.constant 0 : index
    %1 = vector.load %arg2[%c0_1, %c0_2] : memref<128x128xf32, #tpu.memory_space<vmem>>, vector<24x3xf32>
    %c0_3 = arith.constant 0 : index
    %c4 = arith.constant 4 : index
    %2 = vector.load %arg2[%c0_3, %c4] : memref<128x128xf32, #tpu.memory_space<vmem>>, vector<24x1xf32>
    %c24 = arith.constant 24 : index
    %c0_4 = arith.constant 0 : index
    %3 = vector.load %arg2[%c24, %c0_4] : memref<128x128xf32, #tpu.memory_space<vmem>>, vector<3x24xf32>
    %c24_5 = arith.constant 24 : index
    %c24_6 = arith.constant 24 : index
    %4 = vector.load %arg2[%c24_5, %c24_6] : memref<128x128xf32, #tpu.memory_space<vmem>>, vector<3x1xf32>
    %c28 = arith.constant 28 : index
    %c0_7 = arith.constant 0 : index
    %5 = vector.load %arg2[%c28, %c0_7] : memref<128x128xf32, #tpu.memory_space<vmem>>, vector<1x32xf32>
    %c28_8 = arith.constant 28 : index
    %c32 = arith.constant 32 : index
    %6 = vector.load %arg2[%c28_8, %c32] : memref<128x128xf32, #tpu.memory_space<vmem>>, vector<1x1xf32>
    %c32_9 = arith.constant 32 : index
    %c0_10 = arith.constant 0 : index
    %7 = vector.load %arg2[%c32_9, %c0_10] : memref<128x128xf32, #tpu.memory_space<vmem>>, vector<64x1xf32>
    %c32_11 = arith.constant 32 : index
    %c1 = arith.constant 1 : index
    %8 = vector.load %arg2[%c32_11, %c1] : memref<128x128xf32, #tpu.memory_space<vmem>>, vector<64x7xf32>
    %c32_12 = arith.constant 32 : index
    %c8 = arith.constant 8 : index
    %9 = vector.load %arg2[%c32_12, %c8] : memref<128x128xf32, #tpu.memory_space<vmem>>, vector<64x1xf32>
    %c96 = arith.constant 96 : index
    %c0_13 = arith.constant 0 : index
    %10 = vector.load %arg2[%c96, %c0_13] : memref<128x128xf32, #tpu.memory_space<vmem>>, vector<32x64xf32>
    %c96_14 = arith.constant 96 : index
    %c64 = arith.constant 64 : index
    %11 = vector.load %arg2[%c96_14, %c64] : memref<128x128xf32, #tpu.memory_space<vmem>>, vector<32x1xf32>
    %12 = vector.extract_strided_slice %0 {offsets = [0, 0], sizes = [3, 128], strides = [1, 1]} : vector<7x128xf32> to vector<3x128xf32>
    %cst = arith.constant dense<0.000000e+00> : vector<24x128xf32>
    %13 = tpu.matmul %1, %12, %cst {dimension_numbers = #tpu.dot_dimension_numbers<[1], [0], [0], [1], [0, 0, 1, 1], [], []>} : vector<24x3xf32>, vector<3x128xf32>, vector<24x128xf32> -> vector<24x128xf32>
    %14 = vector.broadcast %2 : vector<24x1xf32> to vector<24x128xf32>
    %15 = arith.addf %13, %14 : vector<24x128xf32>
    %cst_15 = arith.constant 0.000000e+00 : f32
    %16 = vector.broadcast %cst_15 : f32 to vector<24x128xf32>
    %17 = arith.maximumf %15, %16 : vector<24x128xf32>
    %cst_16 = arith.constant dense<0.000000e+00> : vector<3x128xf32>
    %18 = tpu.matmul %3, %17, %cst_16 {dimension_numbers = #tpu.dot_dimension_numbers<[1], [0], [0], [1], [0, 0, 1, 1], [], []>} : vector<3x24xf32>, vector<24x128xf32>, vector<3x128xf32> -> vector<3x128xf32>
    %19 = vector.broadcast %4 : vector<3x1xf32> to vector<3x128xf32>
    %20 = arith.addf %18, %19 : vector<3x128xf32>
    %21 = vector.extract_strided_slice %20 {offsets = [0, 0], sizes = [1, 128], strides = [1, 1]} : vector<3x128xf32> to vector<1x128xf32>
    %22 = vector.extract_strided_slice %20 {offsets = [1, 0], sizes = [1, 128], strides = [1, 1]} : vector<3x128xf32> to vector<1x128xf32>
    %cst_17 = arith.constant 0.000000e+00 : f32
    %23 = vector.broadcast %cst_17 : f32 to vector<1x128xf32>
    %24 = arith.maximumf %22, %23 : vector<1x128xf32>
    %cst_18 = arith.constant 0.000000e+00 : f32
    %25 = vector.broadcast %cst_18 : f32 to vector<1x128xf32>
    %26 = arith.subf %25, %24 : vector<1x128xf32>
    %27 = math.exp %26 : vector<1x128xf32>
    %28 = vector.extract_strided_slice %20 {offsets = [2, 0], sizes = [1, 128], strides = [1, 1]} : vector<3x128xf32> to vector<1x128xf32>
    %29 = arith.mulf %21, %27 : vector<1x128xf32>
    %30 = arith.addf %29, %28 : vector<1x128xf32>
    %31 = vector.broadcast %7 : vector<64x1xf32> to vector<64x128xf32>
    %32 = vector.broadcast %30 : vector<1x128xf32> to vector<64x128xf32>
    %33 = arith.mulf %31, %32 : vector<64x128xf32>
    %cst_19 = arith.constant dense<0.000000e+00> : vector<64x128xf32>
    %34 = tpu.matmul %8, %0, %cst_19 {dimension_numbers = #tpu.dot_dimension_numbers<[1], [0], [0], [1], [0, 0, 1, 1], [], []>} : vector<64x7xf32>, vector<7x128xf32>, vector<64x128xf32> -> vector<64x128xf32>
    %35 = arith.addf %33, %34 : vector<64x128xf32>
    %36 = vector.broadcast %9 : vector<64x1xf32> to vector<64x128xf32>
    %37 = arith.addf %35, %36 : vector<64x128xf32>
    %cst_20 = arith.constant 0.000000e+00 : f32
    %38 = vector.broadcast %cst_20 : f32 to vector<64x128xf32>
    %39 = arith.maximumf %37, %38 : vector<64x128xf32>
    %cst_21 = arith.constant dense<0.000000e+00> : vector<32x128xf32>
    %40 = tpu.matmul %10, %39, %cst_21 {dimension_numbers = #tpu.dot_dimension_numbers<[1], [0], [0], [1], [0, 0, 1, 1], [], []>} : vector<32x64xf32>, vector<64x128xf32>, vector<32x128xf32> -> vector<32x128xf32>
    %41 = vector.broadcast %11 : vector<32x1xf32> to vector<32x128xf32>
    %42 = arith.addf %40, %41 : vector<32x128xf32>
    %cst_22 = arith.constant 0.000000e+00 : f32
    %43 = vector.broadcast %cst_22 : f32 to vector<32x128xf32>
    %44 = arith.maximumf %42, %43 : vector<32x128xf32>
    %cst_23 = arith.constant dense<0.000000e+00> : vector<1x128xf32>
    %45 = tpu.matmul %5, %44, %cst_23 {dimension_numbers = #tpu.dot_dimension_numbers<[1], [0], [0], [1], [0, 0, 1, 1], [], []>} : vector<1x32xf32>, vector<32x128xf32>, vector<1x128xf32> -> vector<1x128xf32>
    %46 = vector.broadcast %6 : vector<1x1xf32> to vector<1x128xf32>
    %47 = arith.addf %45, %46 : vector<1x128xf32>
    %c0_24 = arith.constant 0 : index
    %c0_25 = arith.constant 0 : index
    %48 = vector.load %arg3[%c0_24, %c0_25] : memref<1x128xf32, #tpu.memory_space<vmem>>, vector<1x128xf32>
    tpu.vector_store %arg3[%c0_24, %c0_25], %47 {strides = array<i32>} : memref<1x128xf32, #tpu.memory_space<vmem>>, vector<1x128xf32>,
    return
  }
  func.func @transform_0(%arg0: i32) -> (i32, i32) {
    %c0_i32 = arith.constant 0 : i32
    %c0_i32_0 = arith.constant 0 : i32
    return %c0_i32, %arg0 : i32, i32
  }
  func.func @transform_1(%arg0: i32) -> (i32, i32) {
    %c0_i32 = arith.constant 0 : i32
    %c0_i32_0 = arith.constant 0 : i32
    %c0_i32_1 = arith.constant 0 : i32
    return %c0_i32, %c0_i32_0 : i32, i32
  }
  func.func @transform_2(%arg0: i32) -> (i32, i32) {
    %c0_i32 = arith.constant 0 : i32
    %c0_i32_0 = arith.constant 0 : i32
    return %c0_i32, %arg0 : i32, i32
  }
}

</mosaic_0001>

<llo_original>
// kernel: tpu_custom_call.1
$region0: #{tpu_custom_call.1}
  #allocation0 [shape = 'u32[]', space=smem, size = 0x4, offset = 0x4, fixed_abs, tag = 'smem constant byte address 0x4 - core index']
  #allocation1 [shape = 'u32[72,128]{1,0:T(1,128)}', space=vmem, size = 0x9000, scoped, tag = 'internal scratch']
  %s0 = inlined_call_operand.hbm [shape: f32[7,512], index: 0, kind: input, shape index: {}]
  %s1 = inlined_call_operand.hbm [shape: f32[128,128], index: 1, kind: input, shape index: {}]
  %s2 = inlined_call_operand.hbm [shape: f32[1,512], index: 2, kind: output, shape index: {}]
  %s3 = sld [smem:[#allocation0]]
  $region49: #{tpu_custom_call.1} parent=0
    _
  %s5 = ssub.s32 1, %s3
  %s6 = scalar_select 0, %s5, %s3
  $region1: #{tpu_custom_call.1} parent=0
    #allocation2 [shape = 'u8[8192]{0}', space=vmem, size = 0x2000, scoped, tag = 'input window, operand 0']
    #allocation3 [shape = 's32[2]{0}', space=sflag, size = 0x8, scoped, tag = 'scoped memory for tpu_custom_call.1']
    #allocation4 [shape = 's32[2]{0}', space=sflag, size = 0x8, scoped, tag = 'scoped memory for tpu_custom_call.1']
    #allocation5 [shape = 'u8[65536]{0}', space=vmem, size = 0x10000, scoped, tag = 'input window, operand 1, single buffered']
    #allocation6 [shape = 's32[1]{0}', space=sflag, size = 0x4, scoped, tag = 'scoped memory for tpu_custom_call.1']
    #allocation7 [shape = 'u8[1024]{0}', space=vmem, size = 0x400, scoped, tag = 'output window, operand 0']
    %7 = vsyncpa [#allocation3], 0
    %s8 = scalar_lea.sflag [#allocation3], 1
    %9 = vsyncpa %s8, 0
    %10 = vsyncpa [#allocation6], 0
    %11 = vsyncpa [#allocation4], 0
    %s12 = scalar_lea.sflag [#allocation4], 1
    %13 = vsyncpa %s12, 0
    loop: start=0, step=1, limit=6
    $region2: #{tpu_custom_call.1} parent=1 // loop_pre_header
      _
    $region3: #{tpu_custom_call.1} parent=1 // loop_header
      %s15 = sphi 0, %s19
      %p16 = scmp.ge.s32.totalorder %s15, 6
      %s25 = sphi 0, %s27
      %s28 = sphi 0, %s25
      %s29 = sphi 0, %s28
      %s45 = sphi 0, %s29
      %s49 = sphi 0, %s49
      %s51 = sphi 0, %s49
      %s52 = sphi 0, %s51
      %s66 = sphi 0, %s52
      %s72 = sphi 0, %s74
      %s75 = sphi 0, %s72
      %s76 = sphi 0, %s75
      %s92 = sphi 0, %s76
    $region4: #{tpu_custom_call.1} parent=1 // loop_header_branch
      %18 = sbr.rel (%p16) target = $region8
    $region5: #{tpu_custom_call.1} parent=1 // loop_body
      %s20 = ssub.s32 %s15, 1
      %s21 = ssub.s32 %s15, 2
      %s22 = sadd.s32 %s15, 1
      %s23 = ssub.s32 %s15, %s22
      %p24 = scmp.eq.s32.totalorder %s23, 0
      %s26 = sadd.s32 %s25, 1
      %s27 = scalar_select %p24, %s25, %s26
      %p30 = pneg %p24
      %p31 = scmp.eq.s32.totalorder %s15, 3
      %p32 = por %p30, %p31
      %p33 = scmp.ne.s32.totalorder %s25, %s28
      %p34 = scmp.eq.s32.totalorder %s15, 0
      %p35 = por %p33, %p34
      %p36 = scmp.ne.s32.totalorder %s25, %s28
      %p37 = scmp.eq.s32.totalorder %s20, 3
      %p38 = por %p36, %p37
      %p39 = scmp.ne.s32.totalorder %s28, %s29
      %p40 = scmp.eq.s32.totalorder %s20, 0
      %p41 = por %p39, %p40
      %p42 = scmp.ne.s32.totalorder %s28, %s29
      %p43 = scmp.eq.s32.totalorder %s21, 3
      %p44 = por %p42, %p43
      %p46 = scmp.ne.s32.totalorder %s29, %s45
      %p47 = scmp.eq.s32.totalorder %s21, 0
      %p48 = por %p46, %p47
      %s50 = sadd.s32 %s49, 1
      %p53 = scmp.eq.s32.totalorder %s15, 3
      %p54 = scmp.ne.s32.totalorder %s49, %s51
      %p55 = scmp.eq.s32.totalorder %s15, 0
      %p56 = por %p54, %p55
      %p57 = scmp.ne.s32.totalorder %s49, %s51
      %p58 = scmp.eq.s32.totalorder %s20, 3
      %p59 = por %p57, %p58
      %p60 = scmp.ne.s32.totalorder %s51, %s52
      %p61 = scmp.eq.s32.totalorder %s20, 0
      %p62 = por %p60, %p61
      %p63 = scmp.ne.s32.totalorder %s51, %s52
      %p64 = scmp.eq.s32.totalorder %s21, 3
      %p65 = por %p63, %p64
      %p67 = scmp.ne.s32.totalorder %s52, %s66
      %p68 = scmp.eq.s32.totalorder %s21, 0
      %p69 = por %p67, %p68
      %s70 = ssub.s32 %s15, %s22
      %p71 = scmp.eq.s32.totalorder %s70, 0
      %s73 = sadd.s32 %s72, 1
      %s74 = scalar_select %p71, %s72, %s73
      %p77 = pneg %p71
      %p78 = scmp.eq.s32.totalorder %s15, 3
      %p79 = por %p77, %p78
      %p80 = scmp.ne.s32.totalorder %s72, %s75
      %p81 = scmp.eq.s32.totalorder %s15, 0
      %p82 = por %p80, %p81
      %p83 = scmp.ne.s32.totalorder %s72, %s75
      %p84 = scmp.eq.s32.totalorder %s20, 3
      %p85 = por %p83, %p84
      %p86 = scmp.ne.s32.totalorder %s75, %s76
      %p87 = scmp.eq.s32.totalorder %s20, 0
      %p88 = por %p86, %p87
      %p89 = scmp.ne.s32.totalorder %s75, %s76
      %p90 = scmp.eq.s32.totalorder %s21, 3
      %p91 = por %p89, %p90
      %p93 = scmp.ne.s32.totalorder %s76, %s92
      %p94 = scmp.eq.s32.totalorder %s21, 0
      %p95 = por %p93, %p94
      %p96 = scmp.le.s32.totalorder 1, %s15
      %p97 = scmp.lt.s32.totalorder %s15, 5
      %p98 = pnand %p96, %p97
      %p99 = pneg %p98
      // Predicated region
      $region9: #{tpu_custom_call.1} parent=5 // pred_check
        _
      $region10: #{tpu_custom_call.1} parent=5 // pred_check_branch
        %101 = sbr.rel (%p98) target = $region12
      $region11: #{tpu_custom_call.1} parent=5 // pred_region
        %s102 = ssub.s32 %s15, 1
        // Predicated region
        $region13: #{tpu_custom_call.1} parent=11 // pred_check
          %p103 = pneg %p62
        $region14: #{tpu_custom_call.1} parent=11 // pred_check_branch
          %105 = sbr.rel (%p103) target = $region16
        $region15: #{tpu_custom_call.1} parent=11 // pred_region
          %107 = vsyncadd [#allocation6], 0
          %s108 = sshll.u32 %s1, 4
          %s109 = int_to_ptr.hbm [resolvable:$true] %s108
          %s110 = sshll.u32 [#allocation5], 4
          %s111 = int_to_ptr.vmem [resolvable:$true] %s110
          %116 = dma.hbm_to_vmem [thread:$0]  %s109, 2048, %s111, [#allocation6], 128, 128, 8
        $region16: #{tpu_custom_call.1} parent=11 // pred_fallthru
          _
      $region12: #{tpu_custom_call.1} parent=5 // pred_fallthru
        _
      %p117 = scmp.lt.s32.totalorder %s15, 4
      // Predicated region
      $region17: #{tpu_custom_call.1} parent=5 // pred_check
        %p118 = pneg %p117
      $region18: #{tpu_custom_call.1} parent=5 // pred_check_branch
        %120 = sbr.rel (%p118) target = $region20
      $region19: #{tpu_custom_call.1} parent=5 // pred_region
        // Predicated region
        $region21: #{tpu_custom_call.1} parent=19 // pred_check
          %p121 = pneg %p35
        $region22: #{tpu_custom_call.1} parent=19 // pred_check_branch
          %123 = sbr.rel (%p121) target = $region24
        $region23: #{tpu_custom_call.1} parent=19 // pred_region
          %s124 = sand.u32 %s25, 1
          %s125 = scalar_lea.sflag [#allocation3], %s124
          %s126 = sand.u32 %s25, 1
          %s127 = smul.addr %s126, 8
          %s128 = scalar_lea.vmem [#allocation2], %s127
          %130 = vsyncadd %s125, 0
          %s131 = smul.addr %s15, 8
          %s132 = scalar_lea.hbm %s0, %s131
          %s134 = sshll.u32 %s132, 4
          %s135 = int_to_ptr.hbm [resolvable:$true] %s134
          %s136 = sshll.u32 %s128, 4
          %s137 = int_to_ptr.vmem [resolvable:$true] %s136
          %139 = dma.hbm_to_vmem [thread:$0]  %s135, 128, %s137, %s125
        $region24: #{tpu_custom_call.1} parent=19 // pred_fallthru
          _
      $region20: #{tpu_custom_call.1} parent=5 // pred_fallthru
        _
      %p140 = scmp.le.s32.totalorder 1, %s15
      %p141 = scmp.lt.s32.totalorder %s15, 5
      %p142 = pnand %p140, %p141
      %p143 = pneg %p142
      // Predicated region
      $region25: #{tpu_custom_call.1} parent=5 // pred_check
        _
      $region26: #{tpu_custom_call.1} parent=5 // pred_check_branch
        %145 = sbr.rel (%p142) target = $region28
      $region27: #{tpu_custom_call.1} parent=5 // pred_region
        %s146 = ssub.s32 %s15, 1
        %s147 = sand.u32 %s28, 1
        %s148 = scalar_lea.sflag [#allocation3], %s147
        %s149 = sand.u32 %s28, 1
        %s150 = smul.addr %s149, 8
        %s151 = scalar_lea.vmem [#allocation2], %s150
        // Predicated region
        $region29: #{tpu_custom_call.1} parent=27 // pred_check
          %p152 = pneg %p41
        $region30: #{tpu_custom_call.1} parent=27 // pred_check_branch
          %154 = sbr.rel (%p152) target = $region32
        $region31: #{tpu_custom_call.1} parent=27 // pred_region
          %156 = dma.done %s148, 128
        $region32: #{tpu_custom_call.1} parent=27 // pred_fallthru
          _
        // Predicated region
        $region33: #{tpu_custom_call.1} parent=27 // pred_check
          %p157 = pneg %p62
        $region34: #{tpu_custom_call.1} parent=27 // pred_check_branch
          %159 = sbr.rel (%p157) target = $region36
        $region35: #{tpu_custom_call.1} parent=27 // pred_region
          %161 = dma.done [#allocation6], 2048
        $region36: #{tpu_custom_call.1} parent=27 // pred_fallthru
          _
        %s162 = sand.u32 %s28, 1
        %s163 = scalar_lea.sflag [#allocation3], %s162
        %s164 = sand.u32 %s28, 1
        %s165 = smul.addr %s164, 8
        %s166 = scalar_lea.vmem [#allocation2], %s165
        %p167 = pneg %p41
        %p168 = pneg %p38
        %p169 = pneg %p62
        %p170 = pneg %p59
        %p171 = pneg %p88
        %p172 = pneg %p85
        %s173 = sand.u32 %s75, 1
        %s174 = scalar_lea.sflag [#allocation4], %s173
        %s175 = sand.u32 %s75, 1
        %s176 = scalar_lea.vmem [#allocation7], %s175
        %v177 = vld [vmem:[%s151] sm:$0x7f]
        %v178 = vld [vmem:[#allocation5] sm:$0xff]
        %v179 = vld [vmem:[#allocation5 + $0x8] sm:$0xff]
        %v180 = vld [vmem:[#allocation5 + $0x10] sm:$0xff]
        %v181 = vld [vmem:[#allocation5 + $0x18] sm:$0x7]
        %v182 = vld [vmem:[#allocation5 + $0x1c] sm:$0x1]
        %v183 = vld [vmem:[#allocation5 + $0x20] sm:$0xff]
        %v184 = vld [vmem:[#allocation5 + $0x28] sm:$0xff]
        %v185 = vld [vmem:[#allocation5 + $0x30] sm:$0xff]
        %v186 = vld [vmem:[#allocation5 + $0x38] sm:$0xff]
        %v187 = vld [vmem:[#allocation5 + $0x40] sm:$0xff]
        %v188 = vld [vmem:[#allocation5 + $0x48] sm:$0xff]
        %v189 = vld [vmem:[#allocation5 + $0x50] sm:$0xff]
        %v190 = vld [vmem:[#allocation5 + $0x58] sm:$0xff]
        %v191 = vld [vmem:[#allocation5 + $0x60] sm:$0xff]
        %v192 = vld [vmem:[#allocation5 + $0x68] sm:$0xff]
        %v193 = vld [vmem:[#allocation5 + $0x70] sm:$0xff]
        %v194 = vld [vmem:[#allocation5 + $0x78] sm:$0xff]
        %196 = vset.pattern.permute.xlu0 4
        %197 = vperm.xlu0 %196, %v178
        %v198 = vpop.permute.xlu0 %197
        %201 = vset.pattern.permute.xlu0 4
        %202 = vperm.xlu0 %201, %v179
        %v203 = vpop.permute.xlu0 %202
        %206 = vset.pattern.permute.xlu0 4
        %207 = vperm.xlu0 %206, %v180
        %v208 = vpop.permute.xlu0 %207
        %vm210 = vcmask 23552
        %v211 = vsel %vm210, %v178, 0
        %v213 = vsel %vm210, %v179, 0
        %v215 = vsel %vm210, %v180, 0
        %vm217 = vcmask 1042432
        %v219 = vsel %vm217, %v177, 0
        %221 = vmatpush.msra.mxu0 0.0
        %222 = vmatpush.msra.mxu0 0.0
        %223 = vmatpush.msra.mxu0 0.0
        %224 = vmatpush.msra.mxu0 0.0
        %225 = vmatpush.msra.mxu0 0.0
        %226 = vmatpush.msra.mxu0 0.0
        %227 = vmatpush.msra.mxu0 0.0
        %228 = vmatpush.msra.mxu0 0.0
        %229 = vmatpush.msra.mxu0 0.0
        %230 = vmatpush.msra.mxu0 0.0
        %231 = vmatpush.msra.mxu0 0.0
        %232 = vmatpush.msra.mxu0 0.0
        %233 = vmatpush.msra.mxu0 0.0
        %234 = vmatpush.msra.mxu0 0.0
        %235 = vmatpush.msra.mxu0 0.0
        %236 = vmatpush.msra.mxu0 %v219
        %237 = vmatmul.f32.gmra.mxu0 %v211
        %v238 = vpop.f32.mrf.mxu0
        %v239 = vadd.f32 %v198, %v238
        %240 = vmatmul.f32.gmra.mxu0 %v213
        %v241 = vpop.f32.mrf.mxu0
        %v242 = vadd.f32 %v203, %v241
        %243 = vmatmul.f32.gmra.mxu0 %v215
        %v244 = vpop.f32.mrf.mxu0
        %v245 = vadd.f32 %v208, %v244
        %246 = vdwg.mxu0
        %v247 = vmax.f32 %v239, 0.0
        %v248 = vmax.f32 %v242, 0.0
        %v249 = vmax.f32 %v245, 0.0
        %251 = vset.pattern.permute.xlu0 24
        %252 = vperm.xlu0 %251, %v181
        %v253 = vpop.permute.xlu0 %252
        %vm255 = vcmask 195584
        %v256 = vsel %vm255, %v181, 0
        %258 = vmatpush.msra.mxu0 0.0
        %259 = vmatpush.msra.mxu0 0.0
        %260 = vmatpush.msra.mxu0 0.0
        %261 = vmatpush.msra.mxu0 0.0
        %262 = vmatpush.msra.mxu0 0.0
        %263 = vmatpush.msra.mxu0 0.0
        %264 = vmatpush.msra.mxu0 0.0
        %265 = vmatpush.msra.mxu0 0.0
        %266 = vmatpush.msra.mxu0 0.0
        %267 = vmatpush.msra.mxu0 0.0
        %268 = vmatpush.msra.mxu0 0.0
        %269 = vmatpush.msra.mxu0 0.0
        %270 = vmatpush.msra.mxu0 0.0
        %271 = vmatpush.msra.mxu0 %v249
        %272 = vmatpush.msra.mxu0 %v248
        %273 = vmatpush.msra.mxu0 %v247
        %274 = vmatmul.f32.gmra.mxu0 %v256
        %v275 = vpop.f32.mrf.mxu0
        %v276 = vadd.f32 %v253, %v275
        %277 = vdwg.mxu0
        %v278 = vmax.f32 %v276, 0.0
        %v279 = vsub.f32 0.0, %v278
        %v280 = vmul.f32 %v279, 1.442695
        %v281 = vpow.pop %v280
        %v283 = vrot.slane %v281, 1
        %v285 = vmul.f32 %v276, %v283
        %v287 = vrot.slane %v276, 2
        %v289 = vadd.f32 %v285, %v287
        %291 = vset.pattern.permute.xlu0 0
        %292 = vperm.xlu0 %291, %v183
        %v293 = vpop.permute.xlu0 %292
        %296 = vset.pattern.permute.xlu0 0
        %297 = vperm.xlu0 %296, %v184
        %v298 = vpop.permute.xlu0 %297
        %301 = vset.pattern.permute.xlu0 0
        %302 = vperm.xlu0 %301, %v185
        %v303 = vpop.permute.xlu0 %302
        %306 = vset.pattern.permute.xlu0 0
        %307 = vperm.xlu0 %306, %v186
        %v308 = vpop.permute.xlu0 %307
        %311 = vset.pattern.permute.xlu0 0
        %312 = vperm.xlu0 %311, %v187
        %v313 = vpop.permute.xlu0 %312
        %316 = vset.pattern.permute.xlu0 0
        %317 = vperm.xlu0 %316, %v188
        %v318 = vpop.permute.xlu0 %317
        %321 = vset.pattern.permute.xlu0 0
        %322 = vperm.xlu0 %321, %v189
        %v323 = vpop.permute.xlu0 %322
        %326 = vset.pattern.permute.xlu0 0
        %327 = vperm.xlu0 %326, %v190
        %v328 = vpop.permute.xlu0 %327
        %v330 = vperm.slane %v289, 0
        %v331 = vmul.f32 %v293, %v330
        %v332 = vmul.f32 %v298, %v330
        %v333 = vmul.f32 %v303, %v330
        %v334 = vmul.f32 %v308, %v330
        %v335 = vmul.f32 %v313, %v330
        %v336 = vmul.f32 %v318, %v330
        %v337 = vmul.f32 %v323, %v330
        %v338 = vmul.f32 %v328, %v330
        %339 = vrot.lane.b32.xlu0 %v183, 127
        %v340 = vpop.permute.xlu0 %339
        %341 = vrot.lane.b32.xlu0 %v184, 127
        %v342 = vpop.permute.xlu0 %341
        %343 = vrot.lane.b32.xlu0 %v185, 127
        %v344 = vpop.permute.xlu0 %343
        %345 = vrot.lane.b32.xlu0 %v186, 127
        %v346 = vpop.permute.xlu0 %345
        %347 = vrot.lane.b32.xlu0 %v187, 127
        %v348 = vpop.permute.xlu0 %347
        %349 = vrot.lane.b32.xlu0 %v188, 127
        %v350 = vpop.permute.xlu0 %349
        %351 = vrot.lane.b32.xlu0 %v189, 127
        %v352 = vpop.permute.xlu0 %351
        %353 = vrot.lane.b32.xlu0 %v190, 127
        %v354 = vpop.permute.xlu0 %353
        %vm355 = vcmask 56320
        %v356 = vsel %vm355, %v340, 0
        %v358 = vsel %vm355, %v342, 0
        %v360 = vsel %vm355, %v344, 0
        %v362 = vsel %vm355, %v346, 0
        %v364 = vsel %vm355, %v348, 0
        %v366 = vsel %vm355, %v350, 0
        %v368 = vsel %vm355, %v352, 0
        %v370 = vsel %vm355, %v354, 0
        %vm372 = vcmask 1046528
        %v373 = vsel %vm372, %v177, 0
        %375 = vmatpush.msra.mxu0 0.0
        %376 = vmatpush.msra.mxu0 0.0
        %377 = vmatpush.msra.mxu0 0.0
        %378 = vmatpush.msra.mxu0 0.0
        %379 = vmatpush.msra.mxu0 0.0
        %380 = vmatpush.msra.mxu0 0.0
        %381 = vmatpush.msra.mxu0 0.0
        %382 = vmatpush.msra.mxu0 0.0
        %383 = vmatpush.msra.mxu0 0.0
        %384 = vmatpush.msra.mxu0 0.0
        %385 = vmatpush.msra.mxu0 0.0
        %386 = vmatpush.msra.mxu0 0.0
        %387 = vmatpush.msra.mxu0 0.0
        %388 = vmatpush.msra.mxu0 0.0
        %389 = vmatpush.msra.mxu0 0.0
        %390 = vmatpush.msra.mxu0 %v373
        %391 = vmatmul.f32.gmra.mxu0 %v356
        %v392 = vpop.f32.mrf.mxu0
        %v393 = vadd.f32 0.0, %v392
        %394 = vmatmul.f32.gmra.mxu0 %v358
        %v395 = vpop.f32.mrf.mxu0
        %v396 = vadd.f32 0.0, %v395
        %397 = vmatmul.f32.gmra.mxu0 %v360
        %v398 = vpop.f32.mrf.mxu0
        %v399 = vadd.f32 0.0, %v398
        %400 = vmatmul.f32.gmra.mxu0 %v362
        %v401 = vpop.f32.mrf.mxu0
        %v402 = vadd.f32 0.0, %v401
        %403 = vmatmul.f32.gmra.mxu0 %v364
        %v404 = vpop.f32.mrf.mxu0
        %v405 = vadd.f32 0.0, %v404
        %406 = vmatmul.f32.gmra.mxu0 %v366
        %v407 = vpop.f32.mrf.mxu0
        %v408 = vadd.f32 0.0, %v407
        %409 = vmatmul.f32.gmra.mxu0 %v368
        %v410 = vpop.f32.mrf.mxu0
        %v411 = vadd.f32 0.0, %v410
        %412 = vmatmul.f32.gmra.mxu0 %v370
        %v413 = vpop.f32.mrf.mxu0
        %v414 = vadd.f32 0.0, %v413
        %415 = vdwg.mxu0
        %v416 = vadd.f32 %v331, %v393
        %v417 = vadd.f32 %v332, %v396
        %v418 = vadd.f32 %v333, %v399
        %v419 = vadd.f32 %v334, %v402
        %v420 = vadd.f32 %v335, %v405
        %v421 = vadd.f32 %v336, %v408
        %v422 = vadd.f32 %v337, %v411
        %v423 = vadd.f32 %v338, %v414
        %424 = vset.pattern.permute.xlu0 8
        %425 = vperm.xlu0 %424, %v183
        %v426 = vpop.permute.xlu0 %425
        %428 = vset.pattern.permute.xlu0 8
        %429 = vperm.xlu0 %428, %v184
        %v430 = vpop.permute.xlu0 %429
        %432 = vset.pattern.permute.xlu0 8
        %433 = vperm.xlu0 %432, %v185
        %v434 = vpop.permute.xlu0 %433
        %436 = vset.pattern.permute.xlu0 8
        %437 = vperm.xlu0 %436, %v186
        %v438 = vpop.permute.xlu0 %437
        %440 = vset.pattern.permute.xlu0 8
        %441 = vperm.xlu0 %440, %v187
        %v442 = vpop.permute.xlu0 %441
        %444 = vset.pattern.permute.xlu0 8
        %445 = vperm.xlu0 %444, %v188
        %v446 = vpop.permute.xlu0 %445
        %448 = vset.pattern.permute.xlu0 8
        %449 = vperm.xlu0 %448, %v189
        %v450 = vpop.permute.xlu0 %449
        %452 = vset.pattern.permute.xlu0 8
        %453 = vperm.xlu0 %452, %v190
        %v454 = vpop.permute.xlu0 %453
        %v456 = vadd.f32 %v416, %v426
        %v457 = vadd.f32 %v417, %v430
        %v458 = vadd.f32 %v418, %v434
        %v459 = vadd.f32 %v419, %v438
        %v460 = vadd.f32 %v420, %v442
        %v461 = vadd.f32 %v421, %v446
        %v462 = vadd.f32 %v422, %v450
        %v463 = vadd.f32 %v423, %v454
        %v464 = vmax.f32 %v456, 0.0
        %v465 = vmax.f32 %v457, 0.0
        %v466 = vmax.f32 %v458, 0.0
        %v467 = vmax.f32 %v459, 0.0
        %v468 = vmax.f32 %v460, 0.0
        %v469 = vmax.f32 %v461, 0.0
        %v470 = vmax.f32 %v462, 0.0
        %v471 = vmax.f32 %v463, 0.0
        %473 = vset.pattern.permute.xlu0 64
        %474 = vperm.xlu0 %473, %v191
        %v475 = vpop.permute.xlu0 %474
        %478 = vset.pattern.permute.xlu0 64
        %479 = vperm.xlu0 %478, %v192
        %v480 = vpop.permute.xlu0 %479
        %483 = vset.pattern.permute.xlu0 64
        %484 = vperm.xlu0 %483, %v193
        %v485 = vpop.permute.xlu0 %484
        %488 = vset.pattern.permute.xlu0 64
        %489 = vperm.xlu0 %488, %v194
        %v490 = vpop.permute.xlu0 %489
        %vm492 = vcmask 523264
        %v493 = vsel %vm492, %v191, 0
        %v495 = vsel %vm492, %v192, 0
        %v497 = vsel %vm492, %v193, 0
        %v499 = vsel %vm492, %v194, 0
        %501 = vmatpush.msra.mxu0 0.0
        %502 = vmatpush.msra.mxu0 0.0
        %503 = vmatpush.msra.mxu0 0.0
        %504 = vmatpush.msra.mxu0 0.0
        %505 = vmatpush.msra.mxu0 0.0
        %506 = vmatpush.msra.mxu0 0.0
        %507 = vmatpush.msra.mxu0 0.0
        %508 = vmatpush.msra.mxu0 0.0
        %509 = vmatpush.msra.mxu0 %v471
        %510 = vmatpush.msra.mxu0 %v470
        %511 = vmatpush.msra.mxu0 %v469
        %512 = vmatpush.msra.mxu0 %v468
        %513 = vmatpush.msra.mxu0 %v467
        %514 = vmatpush.msra.mxu0 %v466
        %515 = vmatpush.msra.mxu0 %v465
        %516 = vmatpush.msra.mxu0 %v464
        %517 = vmatmul.f32.gmra.mxu0 %v493
        %v518 = vpop.f32.mrf.mxu0
        %v519 = vadd.f32 %v475, %v518
        %520 = vmatmul.f32.gmra.mxu0 %v495
        %v521 = vpop.f32.mrf.mxu0
        %v522 = vadd.f32 %v480, %v521
        %523 = vmatmul.f32.gmra.mxu0 %v497
        %v524 = vpop.f32.mrf.mxu0
        %v525 = vadd.f32 %v485, %v524
        %526 = vmatmul.f32.gmra.mxu0 %v499
        %v527 = vpop.f32.mrf.mxu0
        %v528 = vadd.f32 %v490, %v527
        %529 = vdwg.mxu0
        %v530 = vmax.f32 %v519, 0.0
        %v531 = vmax.f32 %v522, 0.0
        %v532 = vmax.f32 %v525, 0.0
        %v533 = vmax.f32 %v528, 0.0
        %535 = vset.pattern.permute.xlu0 32
        %536 = vperm.xlu0 %535, %v182
        %v537 = vpop.permute.xlu0 %536
        %vm539 = vcmask 261120
        %v540 = vsel %vm539, %v182, 0
        %542 = vmatpush.msra.mxu0 0.0
        %543 = vmatpush.msra.mxu0 0.0
        %544 = vmatpush.msra.mxu0 0.0
        %545 = vmatpush.msra.mxu0 0.0
        %546 = vmatpush.msra.mxu0 0.0
        %547 = vmatpush.msra.mxu0 0.0
        %548 = vmatpush.msra.mxu0 0.0
        %549 = vmatpush.msra.mxu0 0.0
        %550 = vmatpush.msra.mxu0 0.0
        %551 = vmatpush.msra.mxu0 0.0
        %552 = vmatpush.msra.mxu0 0.0
        %553 = vmatpush.msra.mxu0 0.0
        %554 = vmatpush.msra.mxu0 %v533
        %555 = vmatpush.msra.mxu0 %v532
        %556 = vmatpush.msra.mxu0 %v531
        %557 = vmatpush.msra.mxu0 %v530
        %558 = vmatmul.f32.gmra.mxu0 %v540
        %v559 = vpop.f32.mrf.mxu0
        %v560 = vadd.f32 %v537, %v559
        %561 = vdwg.mxu0
        %562 = vst [vmem:[%s176] sm:$0x1] %v560
        %s563 = sand.u32 %s75, 1
        %s564 = scalar_lea.sflag [#allocation4], %s563
        %s565 = sand.u32 %s75, 1
        %s566 = scalar_lea.vmem [#allocation7], %s565
        // Predicated region
        $region37: #{tpu_custom_call.1} parent=27 // pred_check
          %p567 = pneg %p85
        $region38: #{tpu_custom_call.1} parent=27 // pred_check_branch
          %569 = sbr.rel (%p567) target = $region40
        $region39: #{tpu_custom_call.1} parent=27 // pred_region
          %571 = vsyncadd %s564, 0
          %s572 = scalar_lea.hbm %s2, %s20
          %s574 = sshll.u32 %s566, 4
          %s575 = int_to_ptr.vmem [resolvable:$true] %s574
          %s576 = sshll.u32 %s572, 4
          %s577 = int_to_ptr.hbm [resolvable:$true] %s576
          %579 = dma.vmem_to_hbm [thread:$0]  %s575, 16, %s577, %s564
        $region40: #{tpu_custom_call.1} parent=27 // pred_fallthru
          _
      $region28: #{tpu_custom_call.1} parent=5 // pred_fallthru
        _
      %p580 = scmp.le.s32.totalorder 2, %s15
      // Predicated region
      $region41: #{tpu_custom_call.1} parent=5 // pred_check
        %p581 = pneg %p580
      $region42: #{tpu_custom_call.1} parent=5 // pred_check_branch
        %583 = sbr.rel (%p581) target = $region44
      $region43: #{tpu_custom_call.1} parent=5 // pred_region
        %s584 = ssub.s32 %s15, 2
        // Predicated region
        $region45: #{tpu_custom_call.1} parent=43 // pred_check
          %p585 = pneg %p91
        $region46: #{tpu_custom_call.1} parent=43 // pred_check_branch
          %587 = sbr.rel (%p585) target = $region48
        $region47: #{tpu_custom_call.1} parent=43 // pred_region
          %s588 = sand.u32 %s76, 1
          %s589 = scalar_lea.sflag [#allocation4], %s588
          %s590 = sand.u32 %s76, 1
          %s591 = scalar_lea.vmem [#allocation7], %s590
          %593 = dma.done %s589, 16
        $region48: #{tpu_custom_call.1} parent=43 // pred_fallthru
          _
      $region44: #{tpu_custom_call.1} parent=5 // pred_fallthru
        _
    $region6: #{tpu_custom_call.1} parent=1 // loop_footer
      %s19 = sadd.s32 1, %s15
    $region7: #{tpu_custom_call.1} parent=1 // loop_footer_branch
      %14 = sbr.rel target = $region3
    $region8: #{tpu_custom_call.1} parent=1 // loop_exit
      _
    %594 = vsyncpa [#allocation3], 1
    %s595 = scalar_lea.sflag [#allocation3], 1
    %596 = vsyncpa %s595, 1
    %597 = vsyncpa [#allocation6], 1
    %598 = vsyncpa [#allocation4], 1
    %s599 = scalar_lea.sflag [#allocation4], 1
    %600 = vsyncpa %s599, 1

</llo_original>
